<compile_context>
chip_gen: v5e
topology: v5e:2x2
jax: 0.10.0
libtpu: 0.0.40
codegen_flags: <defaults>
</compile_context>

<pallas_src>
import functools

import jax
import jax.numpy as jnp
from jax.experimental import pallas as pl
from jax.experimental.pallas import tpu as pltpu


def _rotary_kernel(freqs_ref, x_ref, pos_ref, o_ref, *, half, mode):
    # freqs_ref: (P, Fw) f32, pre-scaled by 1/P in the wrapper (mean folded in).
    #            Fw == F for 'halves'/'concat'; Fw == D (table is [-f, f]) for 'roll'.
    # x_ref:     (1, tT, D) native dtype    pos_ref: (1, tT, P)    o_ref: (1, tT, D)
    fr = freqs_ref[...].astype(jnp.float32)              # (P, Fw), tiny, resident
    pos = pos_ref[0].astype(jnp.float32)                 # (tT, P)
    P = fr.shape[0]

    # theta[t, f] = sum_p pos[t, p] * (freqs[f, p] / P): unrolled f32 VPU
    # multiply-adds over the tiny P (2..4).  Deliberately avoids the MXU, whose
    # reduced-precision f32 contraction gives phase errors that blow up through
    # sin/cos for |theta| >> 1.
    theta = pos[:, 0:1] * fr[0:1, :]                      # (tT, Fw)
    for p in range(1, P):
        theta = theta + pos[:, p:p + 1] * fr[p:p + 1, :]

    if mode == "roll":
        # Table is [-f, f] along lanes -> theta = [-theta0, theta0]:
        #   cos(theta) = [cos, cos]   (even)     sin(theta) = [-sin, sin]   (odd)
        # Half swap runs on the otherwise-idle XLU; no lane concat, no
        # half-width slices, single lane-dense full-width store.
        cos_dup = jnp.cos(theta)                          # (tT, D)
        sin_sig = jnp.sin(theta)                          # (tT, D)
        x = x_ref[0]                                      # (tT, D) native dtype
        x_swap = pltpu.roll(x, shift=half, axis=1)        # [x2, x1], XLU
        out = x.astype(jnp.float32) * cos_dup + x_swap.astype(jnp.float32) * sin_sig
        o_ref[0] = out.astype(o_ref.dtype)
    else:
        cos = jnp.cos(theta)                              # (tT, F)
        sin = jnp.sin(theta)
        x1 = x_ref[0, :, :half].astype(jnp.float32)       # (tT, F)
        x2 = x_ref[0, :, half:].astype(jnp.float32)       # (tT, F)
        o1 = x1 * cos - x2 * sin
        o2 = x1 * sin + x2 * cos
        if mode == "halves":
            # F % 128 == 0: both stores are unmasked lane-dense vst, no concat
            # temporary and lower vreg pressure.
            o_ref[0, :, :half] = o1.astype(o_ref.dtype)
            o_ref[0, :, half:] = o2.astype(o_ref.dtype)
        else:
            # Small heads (D not a multiple of 128): single full-width store.
            # TODO(synk): for D < 128 pack 128 // D tokens per vreg row so the
            # trig/rotation math uses all 128 lanes and the store is unmasked.
            o_ref[0] = jnp.concatenate([o1, o2], axis=-1).astype(o_ref.dtype)


def rotary_nd(x_NTD, pos_NTP, freqs_FP, *, seq_block=None):
    N, T, D = x_NTD.shape
    Np, Tp, P = pos_NTP.shape
    F = D // 2
    assert (Np, Tp) == (N, T)
    assert D == 2 * F, "head_dim must be even"
    assert freqs_FP.shape == (F, P)

    # Fold the 1/P of the mean into the (tiny) frequency table once in the
    # wrapper (ulp-level rounding change only) and pre-transpose to (P, F) so
    # rows broadcast along lanes inside the kernel.
    freqs_PF = (jnp.asarray(freqs_FP, jnp.float32) / P).T            # (P, F)

    if F % 128 == 0:
        mode, freqs_tab = "halves", freqs_PF                          # (P, F)
    elif D % 128 == 0:
        # Signed duplicated table for the roll path: [-f, f] along lanes.
        mode = "roll"
        freqs_tab = jnp.concatenate([-freqs_PF, freqs_PF], axis=1)    # (P, D)
    else:
        mode, freqs_tab = "concat", freqs_PF                          # (P, F)

    x_isz = jnp.dtype(x_NTD.dtype).itemsize
    p_isz = jnp.dtype(pos_NTP.dtype).itemsize
    lane = 128
    d_pad = pl.cdiv(D, lane) * lane                                   # lane-padded D

    if seq_block is None:
        # Real VMEM footprint per sequence row (lane padding included):
        #   x in + out: double-buffered, d_pad lanes each
        #   pos:        double-buffered, padded to a full 128-lane row
        #   temporaries: ~6 live f32 D-wide values (theta/cos/sin/products)
        row_bytes = 2 * (2 * d_pad * x_isz + lane * p_isz) + 6 * d_pad * 4
        budget = 16 * 1024 * 1024
        cand = max(8, min(budget // max(row_bytes, 1), 2048))
        cand = (cand // 8) * 8
        # Keep enough grid steps for pipeline overlap and both v7x TensorCores
        # (aim for N * num_seq_tiles >= 8), but never shrink below 256 rows for
        # it: big tiles are what keeps v5e/v6e at the HBM roofline.
        tiles_needed = pl.cdiv(8, N)
        if T // tiles_needed >= 256:
            cand = min(cand, (T // tiles_needed) // 8 * 8)
        seq_block = T if T <= cand else cand
    if seq_block >= T:
        seq_block = T                                     # full axis -> any size OK
    else:
        assert seq_block % 8 == 0, "sequence tile must be a multiple of 8"

    grid = (N, pl.cdiv(T, seq_block))

    # Explicit scoped-VMEM limit derived from the real double-buffered
    # footprint + headroom; decoupled from the generation-dependent defaults
    # and well inside v7x's 64 MiB physical VMEM.
    io_bytes = 2 * seq_block * (2 * d_pad * x_isz + lane * p_isz)
    tmp_bytes = 6 * seq_block * d_pad * 4
    vmem_limit = int(min(max(io_bytes + tmp_bytes + (2 << 20), 8 << 20), 40 << 20))

    fw = freqs_tab.shape[1]
    cost = pl.CostEstimate(
        flops=(2 * P + 4) * N * T * fw,
        transcendentals=2 * N * T * fw,
        bytes_accessed=(2 * x_NTD.size * x_isz
                        + pos_NTP.size * p_isz
                        + freqs_tab.size * 4),
    )

    kernel = functools.partial(_rotary_kernel, half=F, mode=mode)

    # NOTE: when T % seq_block != 0 the padded tail block computes sin/cos on
    # whatever the pos padding contains; those rows are never stored back, so
    # it is benign -- do not add any cross-row reduction to this kernel.
    return pl.pallas_call(
        kernel,
        out_shape=jax.ShapeDtypeStruct((N, T, D), x_NTD.dtype),
        grid_spec=pltpu.PrefetchScalarGridSpec(
            num_scalar_prefetch=0,
            grid=grid,
            in_specs=[
                pl.BlockSpec((P, fw), lambda n, s: (0, 0)),                 # freqs
                pl.BlockSpec((1, seq_block, D), lambda n, s: (n, s, 0)),    # x tile
                pl.BlockSpec((1, seq_block, P), lambda n, s: (n, s, 0)),    # pos tile
            ],
            out_specs=pl.BlockSpec((1, seq_block, D), lambda n, s: (n, s, 0)),
        ),
        compiler_params=pltpu.CompilerParams(
            dimension_semantics=("parallel", "parallel"),
            vmem_limit_bytes=vmem_limit,
        ),
        cost_estimate=cost,
    )(freqs_tab, x_NTD, pos_NTP)


def make_freqs(key, head_dim, pos_dim, min_freq, max_freq):
    """Deterministic parameter init mirroring RotaryNd.__init__."""
    n_freqs = head_dim // 2
    freqs = jax.random.normal(key, (n_freqs, pos_dim), dtype=jnp.float32)
    rms = jnp.sqrt(jnp.mean(freqs ** 2, axis=-1, keepdims=True))
    freqs = freqs / rms
    scale = min_freq * (max_freq / min_freq) ** jnp.linspace(0.0, 1.0, n_freqs)
    freqs = freqs * scale[:, None]
    return freqs


def rotary_nd_ref(x_NTD, pos_NTP, freqs_FP):
    """Plain-JAX reference mirroring the PyTorch forward exactly."""
    theta = jnp.mean(freqs_FP * pos_NTP[..., None, :], axis=-1)       # (N, T, F)
    cos, sin = jnp.cos(theta), jnp.sin(theta)
    F = freqs_FP.shape[0]
    xf = x_NTD.astype(jnp.float32)
    x1, x2 = xf[..., :F], xf[..., F:]
    out = jnp.concatenate([x1 * cos - x2 * sin, x1 * sin + x2 * cos], axis=-1)
    return out.astype(x_NTD.dtype)


def _check(x_NTD, pos_NTP, freqs_FP, **kw):
    out = jax.block_until_ready(rotary_nd(x_NTD, pos_NTP, freqs_FP, **kw))
    ref = rotary_nd_ref(x_NTD, pos_NTP, freqs_FP)
    assert out.shape == x_NTD.shape and out.dtype == x_NTD.dtype
    err = float(jnp.max(jnp.abs(out.astype(jnp.float32) - ref.astype(jnp.float32))))
    assert jnp.allclose(out, ref, atol=1e-4, rtol=1e-4), err


if __name__ == "__main__":
    min_freq, max_freq = 0.1, 10.0
    key = jax.random.PRNGKey(0)
    k1, k2, k3, k4, k5, k6, k7, k8, k9 = jax.random.split(key, 9)

    # Test 1: module-spec small shapes (concat fallback path): D=32 (F=16), P=4.
    N, T, D, P = 2, 8, 32, 4
    freqs_FP = make_freqs(k1, D, P, min_freq, max_freq)
    x_NTD = jax.random.normal(k2, (N, T, D), dtype=jnp.float32)
    pos_NTP = jax.random.uniform(k3, (N, T, P), dtype=jnp.float32)   # positions in [0,1)
    _check(x_NTD, pos_NTP, freqs_FP)

    # Test 2: roll path (D % 128 == 0) with a tiled 2-D (batch, seq) grid.
    N, T, D, P = 2, 128, 128, 3
    freqs_FP = make_freqs(k4, D, P, min_freq, max_freq)
    x_NTD = jax.random.normal(k5, (N, T, D), dtype=jnp.float32)
    pos_NTP = jax.random.uniform(k6, (N, T, P), dtype=jnp.float32)
    _check(x_NTD, pos_NTP, freqs_FP, seq_block=64)

    # Test 3: halves path (F % 128 == 0): lane-dense slice loads/stores.
    N, T, D, P = 2, 16, 256, 2
    freqs_FP = make_freqs(k7, D, P, min_freq, max_freq)
    x_NTD = jax.random.normal(k8, (N, T, D), dtype=jnp.float32)
    pos_NTP = jax.random.uniform(k9, (N, T, P), dtype=jnp.float32)
    _check(x_NTD, pos_NTP, freqs_FP)

    print("KERNEL_OK")
</pallas_src>

<mosaic_0001>
module attributes {stable_mosaic.version = 11 : i64} {
  func.func @_rotary_kernel(%arg0: i32, %arg1: i32, %arg2: memref<4x16xf32, #tpu.memory_space<vmem>>, %arg3: memref<1x8x32xf32, #tpu.memory_space<vmem>>, %arg4: memref<1x8x4xf32, #tpu.memory_space<vmem>>, %arg5: memref<1x8x32xf32, #tpu.memory_space<vmem>>) attributes {dimension_semantics = [#tpu.dimension_semantics<parallel>, #tpu.dimension_semantics<parallel>], iteration_bounds = array<i64: 2, 1>, scalar_prefetch = 0 : i64, scratch_operands = 0 : i64, tpu.core_type = #tpu.core_type<tc>, window_params = [{pipeline_mode = #tpu.pipeline_mode<synchronous>, transform_indices = @transform_0, window_bounds = array<i64: 4, 16>}, {transform_indices = @transform_1, window_bounds = array<i64: 1, 8, 32>}, {transform_indices = @transform_2, window_bounds = array<i64: 1, 8, 4>}, {transform_indices = @transform_3, window_bounds = array<i64: 1, 8, 32>}]} {
    %c0 = arith.constant 0 : index
    %c0_0 = arith.constant 0 : index
    %0 = vector.load %arg2[%c0, %c0_0] : memref<4x16xf32, #tpu.memory_space<vmem>>, vector<4x16xf32>
    %c0_1 = arith.constant 0 : index
    %c0_2 = arith.constant 0 : index
    %c0_3 = arith.constant 0 : index
    %1 = vector.load %arg4[%c0_1, %c0_2, %c0_3] : memref<1x8x4xf32, #tpu.memory_space<vmem>>, vector<1x8x4xf32>
    %2 = vector.shape_cast %1 : vector<1x8x4xf32> to vector<8x4xf32>
    %3 = vector.extract_strided_slice %2 {offsets = [0, 0], sizes = [8, 1], strides = [1, 1]} : vector<8x4xf32> to vector<8x1xf32>
    %4 = vector.extract_strided_slice %0 {offsets = [0, 0], sizes = [1, 16], strides = [1, 1]} : vector<4x16xf32> to vector<1x16xf32>
    %5 = vector.broadcast %3 : vector<8x1xf32> to vector<8x16xf32>
    %6 = vector.broadcast %4 : vector<1x16xf32> to vector<8x16xf32>
    %7 = arith.mulf %5, %6 : vector<8x16xf32>
    %8 = vector.extract_strided_slice %2 {offsets = [0, 1], sizes = [8, 1], strides = [1, 1]} : vector<8x4xf32> to vector<8x1xf32>
    %9 = vector.extract_strided_slice %0 {offsets = [1, 0], sizes = [1, 16], strides = [1, 1]} : vector<4x16xf32> to vector<1x16xf32>
    %10 = vector.broadcast %8 : vector<8x1xf32> to vector<8x16xf32>
    %11 = vector.broadcast %9 : vector<1x16xf32> to vector<8x16xf32>
    %12 = arith.mulf %10, %11 : vector<8x16xf32>
    %13 = arith.addf %7, %12 : vector<8x16xf32>
    %14 = vector.extract_strided_slice %2 {offsets = [0, 2], sizes = [8, 1], strides = [1, 1]} : vector<8x4xf32> to vector<8x1xf32>
    %15 = vector.extract_strided_slice %0 {offsets = [2, 0], sizes = [1, 16], strides = [1, 1]} : vector<4x16xf32> to vector<1x16xf32>
    %16 = vector.broadcast %14 : vector<8x1xf32> to vector<8x16xf32>
    %17 = vector.broadcast %15 : vector<1x16xf32> to vector<8x16xf32>
    %18 = arith.mulf %16, %17 : vector<8x16xf32>
    %19 = arith.addf %13, %18 : vector<8x16xf32>
    %20 = vector.extract_strided_slice %2 {offsets = [0, 3], sizes = [8, 1], strides = [1, 1]} : vector<8x4xf32> to vector<8x1xf32>
    %21 = vector.extract_strided_slice %0 {offsets = [3, 0], sizes = [1, 16], strides = [1, 1]} : vector<4x16xf32> to vector<1x16xf32>
    %22 = vector.broadcast %20 : vector<8x1xf32> to vector<8x16xf32>
    %23 = vector.broadcast %21 : vector<1x16xf32> to vector<8x16xf32>
    %24 = arith.mulf %22, %23 : vector<8x16xf32>
    %25 = arith.addf %19, %24 : vector<8x16xf32>
    %26 = math.cos %25 : vector<8x16xf32>
    %27 = math.sin %25 : vector<8x16xf32>
    %c0_4 = arith.constant 0 : index
    %c0_5 = arith.constant 0 : index
    %c0_6 = arith.constant 0 : index
    %28 = vector.load %arg3[%c0_4, %c0_5, %c0_6] : memref<1x8x32xf32, #tpu.memory_space<vmem>>, vector<1x8x16xf32>
    %29 = vector.shape_cast %28 : vector<1x8x16xf32> to vector<8x16xf32>
    %c0_7 = arith.constant 0 : index
    %c0_8 = arith.constant 0 : index
    %c16 = arith.constant 16 : index
    %30 = vector.load %arg3[%c0_7, %c0_8, %c16] : memref<1x8x32xf32, #tpu.memory_space<vmem>>, vector<1x8x16xf32>
    %31 = vector.shape_cast %30 : vector<1x8x16xf32> to vector<8x16xf32>
    %32 = arith.mulf %29, %26 : vector<8x16xf32>
    %33 = arith.mulf %31, %27 : vector<8x16xf32>
    %34 = arith.subf %32, %33 : vector<8x16xf32>
    %35 = arith.mulf %29, %27 : vector<8x16xf32>
    %36 = arith.mulf %31, %26 : vector<8x16xf32>
    %37 = arith.addf %35, %36 : vector<8x16xf32>
    %38 = tpu.concatenate %34, %37 in 1 : vector<8x16xf32>, vector<8x16xf32> -> vector<8x32xf32>
    %c0_9 = arith.constant 0 : index
    %c0_10 = arith.constant 0 : index
    %c0_11 = arith.constant 0 : index
    %39 = vector.load %arg5[%c0_9, %c0_10, %c0_11] : memref<1x8x32xf32, #tpu.memory_space<vmem>>, vector<1x8x32xf32>
    %40 = vector.shape_cast %39 : vector<1x8x32xf32> to vector<8x32xf32>
    %41 = vector.shape_cast %38 : vector<8x32xf32> to vector<1x8x32xf32>
    tpu.vector_store %arg5[%c0_9, %c0_10, %c0_11], %41 {strides = array<i32>} : memref<1x8x32xf32, #tpu.memory_space<vmem>>, vector<1x8x32xf32>,
    return
  }
  func.func @transform_0(%arg0: i32, %arg1: i32) -> (i32, i32) {
    %c0_i32 = arith.constant 0 : i32
    %c0_i32_0 = arith.constant 0 : i32
    %c0_i32_1 = arith.constant 0 : i32
    return %c0_i32, %c0_i32_0 : i32, i32
  }
  func.func @transform_1(%arg0: i32, %arg1: i32) -> (i32, i32, i32) {
    %c0_i32 = arith.constant 0 : i32
    %c0_i32_0 = arith.constant 0 : i32
    return %arg0, %arg1, %c0_i32 : i32, i32, i32
  }
  func.func @transform_2(%arg0: i32, %arg1: i32) -> (i32, i32, i32) {
    %c0_i32 = arith.constant 0 : i32
    %c0_i32_0 = arith.constant 0 : i32
    return %arg0, %arg1, %c0_i32 : i32, i32, i32
  }
  func.func @transform_3(%arg0: i32, %arg1: i32) -> (i32, i32, i32) {
    %c0_i32 = arith.constant 0 : i32
    %c0_i32_0 = arith.constant 0 : i32
    return %arg0, %arg1, %c0_i32 : i32, i32, i32
  }
}

</mosaic_0001>

<llo_original>
// kernel: tpu_custom_call.1
$region0: #{tpu_custom_call.1}
  #allocation0 [shape = 'u32[]', space=smem, size = 0x4, offset = 0x4, fixed_abs, tag = 'smem constant byte address 0x4 - core index']
  #allocation1 [shape = 'u32[72,128]{1,0:T(1,128)}', space=vmem, size = 0x9000, scoped, tag = 'internal scratch']
  %s0 = inlined_call_operand.vmem [shape: f32[4,16], index: 0, kind: input, shape index: {}]
  %s1 = inlined_call_operand.vmem [shape: f32[2,8,32], index: 1, kind: input, shape index: {}]
  %s2 = inlined_call_operand.vmem [shape: f32[2,8,4], index: 2, kind: input, shape index: {}]
  %s3 = inlined_call_operand.hbm [shape: f32[2,8,32], index: 3, kind: output, shape index: {}]
  %s4 = sld [smem:[#allocation0]]
  $region45: #{tpu_custom_call.1} parent=0
    _
  %s6 = ssub.s32 1, %s4
  %s7 = scalar_select 0, %s6, %s4
  $region1: #{tpu_custom_call.1} parent=0
    #allocation2 [shape = 'u8[8192]{0}', space=vmem, size = 0x2000, scoped, tag = 'output window, operand 0']
    #allocation3 [shape = 's32[2]{0}', space=sflag, size = 0x8, scoped, tag = 'scoped memory for tpu_custom_call.1']
    %8 = vsyncpa [#allocation3], 0
    %s9 = scalar_lea.sflag [#allocation3], 1
    %10 = vsyncpa %s9, 0
    loop: start=0, step=1, limit=4
    $region2: #{tpu_custom_call.1} parent=1 // loop_pre_header
      _
    $region3: #{tpu_custom_call.1} parent=1 // loop_header
      %s12 = sphi 0, %s16
      %p13 = scmp.ge.s32.totalorder %s12, 4
      %s19 = sphi 0, %s31
      %s20 = sphi 0, %s27
      %s21 = sphi 0, %s19
      %s22 = sphi 0, %s20
      %s23 = sphi 0, %s21
      %s24 = sphi 0, %s22
      %s32 = sphi 0, %s32
      %s34 = sphi 0, %s32
      %s35 = sphi 0, %s34
      %s49 = sphi 0, %s35
      %s57 = sphi 0, %s59
      %s60 = sphi 0, %s57
      %s61 = sphi 0, %s60
      %s77 = sphi 0, %s61
      %s85 = sphi 0, %s87
      %s88 = sphi 0, %s85
      %s89 = sphi 0, %s88
      %s105 = sphi 0, %s89
      %s113 = sphi 0, %s115
      %s116 = sphi 0, %s113
      %s117 = sphi 0, %s116
      %s133 = sphi 0, %s117
    $region4: #{tpu_custom_call.1} parent=1 // loop_header_branch
      %15 = sbr.rel (%p13) target = $region8
    $region5: #{tpu_custom_call.1} parent=1 // loop_body
      %s17 = ssub.s32 %s12, 1
      %s18 = ssub.s32 %s12, 2
      %s25 = sadd.s32 1, %s20
      %p26 = scmp.ge.s32.totalorder %s25, 1
      %s27 = scalar_select %p26, 0, %s25
      %s28 = sadd.s32 1, %s19
      %s29 = scalar_select %p26, %s28, %s19
      %p30 = scmp.ge.s32.totalorder %s29, 2
      %s31 = scalar_select %p30, 0, %s29
      %s33 = sadd.s32 %s32, 1
      %p36 = scmp.eq.s32.totalorder %s12, 1
      %p37 = scmp.ne.s32.totalorder %s32, %s34
      %p38 = scmp.eq.s32.totalorder %s12, 0
      %p39 = por %p37, %p38
      %p40 = scmp.ne.s32.totalorder %s32, %s34
      %p41 = scmp.eq.s32.totalorder %s17, 1
      %p42 = por %p40, %p41
      %p43 = scmp.ne.s32.totalorder %s34, %s35
      %p44 = scmp.eq.s32.totalorder %s17, 0
      %p45 = por %p43, %p44
      %p46 = scmp.ne.s32.totalorder %s34, %s35
      %p47 = scmp.eq.s32.totalorder %s18, 1
      %p48 = por %p46, %p47
      %p50 = scmp.ne.s32.totalorder %s35, %s49
      %p51 = scmp.eq.s32.totalorder %s18, 0
      %p52 = por %p50, %p51
      %s53 = ssub.s32 %s19, %s31
      %s54 = ssub.s32 %s20, %s27
      %s55 = sor.u32 %s53, %s54
      %p56 = scmp.eq.s32.totalorder %s55, 0
      %s58 = sadd.s32 %s57, 1
      %s59 = scalar_select %p56, %s57, %s58
      %p62 = pneg %p56
      %p63 = scmp.eq.s32.totalorder %s12, 1
      %p64 = por %p62, %p63
      %p65 = scmp.ne.s32.totalorder %s57, %s60
      %p66 = scmp.eq.s32.totalorder %s12, 0
      %p67 = por %p65, %p66
      %p68 = scmp.ne.s32.totalorder %s57, %s60
      %p69 = scmp.eq.s32.totalorder %s17, 1
      %p70 = por %p68, %p69
      %p71 = scmp.ne.s32.totalorder %s60, %s61
      %p72 = scmp.eq.s32.totalorder %s17, 0
      %p73 = por %p71, %p72
      %p74 = scmp.ne.s32.totalorder %s60, %s61
      %p75 = scmp.eq.s32.totalorder %s18, 1
      %p76 = por %p74, %p75
      %p78 = scmp.ne.s32.totalorder %s61, %s77
      %p79 = scmp.eq.s32.totalorder %s18, 0
      %p80 = por %p78, %p79
      %s81 = ssub.s32 %s19, %s31
      %s82 = ssub.s32 %s20, %s27
      %s83 = sor.u32 %s81, %s82
      %p84 = scmp.eq.s32.totalorder %s83, 0
      %s86 = sadd.s32 %s85, 1
      %s87 = scalar_select %p84, %s85, %s86
      %p90 = pneg %p84
      %p91 = scmp.eq.s32.totalorder %s12, 1
      %p92 = por %p90, %p91
      %p93 = scmp.ne.s32.totalorder %s85, %s88
      %p94 = scmp.eq.s32.totalorder %s12, 0
      %p95 = por %p93, %p94
      %p96 = scmp.ne.s32.totalorder %s85, %s88
      %p97 = scmp.eq.s32.totalorder %s17, 1
      %p98 = por %p96, %p97
      %p99 = scmp.ne.s32.totalorder %s88, %s89
      %p100 = scmp.eq.s32.totalorder %s17, 0
      %p101 = por %p99, %p100
      %p102 = scmp.ne.s32.totalorder %s88, %s89
      %p103 = scmp.eq.s32.totalorder %s18, 1
      %p104 = por %p102, %p103
      %p106 = scmp.ne.s32.totalorder %s89, %s105
      %p107 = scmp.eq.s32.totalorder %s18, 0
      %p108 = por %p106, %p107
      %s109 = ssub.s32 %s19, %s31
      %s110 = ssub.s32 %s20, %s27
      %s111 = sor.u32 %s109, %s110
      %p112 = scmp.eq.s32.totalorder %s111, 0
      %s114 = sadd.s32 %s113, 1
      %s115 = scalar_select %p112, %s113, %s114
      %p118 = pneg %p112
      %p119 = scmp.eq.s32.totalorder %s12, 1
      %p120 = por %p118, %p119
      %p121 = scmp.ne.s32.totalorder %s113, %s116
      %p122 = scmp.eq.s32.totalorder %s12, 0
      %p123 = por %p121, %p122
      %p124 = scmp.ne.s32.totalorder %s113, %s116
      %p125 = scmp.eq.s32.totalorder %s17, 1
      %p126 = por %p124, %p125
      %p127 = scmp.ne.s32.totalorder %s116, %s117
      %p128 = scmp.eq.s32.totalorder %s17, 0
      %p129 = por %p127, %p128
      %p130 = scmp.ne.s32.totalorder %s116, %s117
      %p131 = scmp.eq.s32.totalorder %s18, 1
      %p132 = por %p130, %p131
      %p134 = scmp.ne.s32.totalorder %s117, %s133
      %p135 = scmp.eq.s32.totalorder %s18, 0
      %p136 = por %p134, %p135
      %p137 = scmp.le.s32.totalorder 1, %s12
      %p138 = scmp.lt.s32.totalorder %s12, 3
      %p139 = pnand %p137, %p138
      %p140 = pneg %p139
      // Predicated region
      $region9: #{tpu_custom_call.1} parent=5 // pred_check
        _
      $region10: #{tpu_custom_call.1} parent=5 // pred_check_branch
        %142 = sbr.rel (%p139) target = $region12
      $region11: #{tpu_custom_call.1} parent=5 // pred_region
        %s143 = ssub.s32 %s12, 1
        // Predicated region
        $region13: #{tpu_custom_call.1} parent=11 // pred_check
          %p144 = pneg %p45
        $region14: #{tpu_custom_call.1} parent=11 // pred_check_branch
          %146 = sbr.rel (%p144) target = $region16
        $region15: #{tpu_custom_call.1} parent=11 // pred_region
          _
        $region16: #{tpu_custom_call.1} parent=11 // pred_fallthru
          _
      $region12: #{tpu_custom_call.1} parent=5 // pred_fallthru
        _
      %p147 = scmp.lt.s32.totalorder %s12, 2
      // Predicated region
      $region17: #{tpu_custom_call.1} parent=5 // pred_check
        %p148 = pneg %p147
      $region18: #{tpu_custom_call.1} parent=5 // pred_check_branch
        %150 = sbr.rel (%p148) target = $region20
      $region19: #{tpu_custom_call.1} parent=5 // pred_region
        // Predicated region
        $region21: #{tpu_custom_call.1} parent=19 // pred_check
          %p151 = pneg %p67
        $region22: #{tpu_custom_call.1} parent=19 // pred_check_branch
          %153 = sbr.rel (%p151) target = $region24
        $region23: #{tpu_custom_call.1} parent=19 // pred_region
          %p154 = scmp.lt.s32.totalorder %s19, 1
          %s155 = scalar_select %p154, %s19, 1
          %p156 = scmp.lt.s32.totalorder %s20, 0
          %s157 = scalar_select %p156, %s20, 0
          %s158 = sadd.s32 %s157, %s155
          %s159 = smul.addr %s158, 8
          %s160 = scalar_lea.vmem %s1, %s159
        $region24: #{tpu_custom_call.1} parent=19 // pred_fallthru
          _
        // Predicated region
        $region25: #{tpu_custom_call.1} parent=19 // pred_check
          %p161 = pneg %p95
        $region26: #{tpu_custom_call.1} parent=19 // pred_check_branch
          %163 = sbr.rel (%p161) target = $region28
        $region27: #{tpu_custom_call.1} parent=19 // pred_region
          %p164 = scmp.lt.s32.totalorder %s19, 1
          %s165 = scalar_select %p164, %s19, 1
          %p166 = scmp.lt.s32.totalorder %s20, 0
          %s167 = scalar_select %p166, %s20, 0
          %s168 = sadd.s32 %s167, %s165
          %s169 = smul.addr %s168, 8
          %s170 = scalar_lea.vmem %s2, %s169
        $region28: #{tpu_custom_call.1} parent=19 // pred_fallthru
          _
      $region20: #{tpu_custom_call.1} parent=5 // pred_fallthru
        _
      %p171 = scmp.le.s32.totalorder 1, %s12
      %p172 = scmp.lt.s32.totalorder %s12, 3
      %p173 = pnand %p171, %p172
      %p174 = pneg %p173
      // Predicated region
      $region29: #{tpu_custom_call.1} parent=5 // pred_check
        _
      $region30: #{tpu_custom_call.1} parent=5 // pred_check_branch
        %176 = sbr.rel (%p173) target = $region32
      $region31: #{tpu_custom_call.1} parent=5 // pred_region
        %s177 = ssub.s32 %s12, 1
        %p178 = pneg %p45
        %p179 = pneg %p42
        %p180 = scmp.lt.s32.totalorder %s21, 1
        %s181 = scalar_select %p180, %s21, 1
        %p182 = scmp.lt.s32.totalorder %s22, 0
        %s183 = scalar_select %p182, %s22, 0
        %s184 = sadd.s32 %s183, %s181
        %s185 = smul.addr %s184, 8
        %s186 = scalar_lea.vmem %s1, %s185
        %p187 = pneg %p73
        %p188 = pneg %p70
        %p189 = scmp.lt.s32.totalorder %s21, 1
        %s190 = scalar_select %p189, %s21, 1
        %p191 = scmp.lt.s32.totalorder %s22, 0
        %s192 = scalar_select %p191, %s22, 0
        %s193 = sadd.s32 %s192, %s190
        %s194 = smul.addr %s193, 8
        %s195 = scalar_lea.vmem %s2, %s194
        %p196 = pneg %p101
        %p197 = pneg %p98
        %p198 = pneg %p129
        %p199 = pneg %p126
        %s200 = sand.u32 %s116, 1
        %s201 = scalar_lea.sflag [#allocation3], %s200
        %s202 = sand.u32 %s116, 1
        %s203 = smul.addr %s202, 8
        %s204 = scalar_lea.vmem [#allocation2], %s203
        %p205 = scmp.lt.s32.totalorder %s21, 1
        %s206 = scalar_select %p205, %s21, 1
        %p207 = scmp.lt.s32.totalorder %s22, 0
        %s208 = scalar_select %p207, %s22, 0
        %s209 = sadd.s32 %s208, %s206
        %s210 = smul.addr %s209, 8
        %s211 = scalar_lea.vmem %s1, %s210
        %p212 = scmp.lt.s32.totalorder %s21, 1
        %s213 = scalar_select %p212, %s21, 1
        %p214 = scmp.lt.s32.totalorder %s22, 0
        %s215 = scalar_select %p214, %s22, 0
        %s216 = sadd.s32 %s215, %s213
        %s217 = smul.addr %s216, 8
        %s218 = scalar_lea.vmem %s2, %s217
        %v219 = vld [vmem:[%s0] sm:$0xf]
        %v220 = vld [vmem:[%s218] sm:$0xff]
        %222 = vset.pattern.permute.xlu0 0
        %223 = vperm.xlu0 %222, %v220
        %v224 = vpop.permute.xlu0 %223
        %v226 = vperm.slane %v219, 0
        %v227 = vmul.f32 %v224, %v226
        %228 = vset.pattern.permute.xlu0 1
        %229 = vperm.xlu0 %228, %v220
        %v230 = vpop.permute.xlu0 %229
        %v232 = vperm.slane %v219, 1
        %v233 = vmul.f32 %v230, %v232
        %v234 = vadd.f32 %v227, %v233
        %235 = vset.pattern.permute.xlu0 2
        %236 = vperm.xlu0 %235, %v220
        %v237 = vpop.permute.xlu0 %236
        %v239 = vperm.slane %v219, 2
        %v240 = vmul.f32 %v237, %v239
        %v241 = vadd.f32 %v234, %v240
        %242 = vset.pattern.permute.xlu0 3
        %243 = vperm.xlu0 %242, %v220
        %v244 = vpop.permute.xlu0 %243
        %v246 = vperm.slane %v219, 3
        %v247 = vmul.f32 %v244, %v246
        %v248 = vadd.f32 %v241, %v247
        %v249 = vand.u32 2147483647, %v248
        %vm250 = vcmp.le.f32.partialorder %v249, 0.7853982
        %vm251 = vcmp.lt.s32.totalorder %v248, 0
        %v252 = vand.u32 %v248, 2139095040
        %v253 = vshrl.u32 %v252, 23
        %v254 = vsub.s32 %v253, 127
        %v255 = vand.u32 2147483647, %v248
        %v256 = vand.u32 %v255, 8388607
        %v257 = vor.u32 %v256, 8388608
        %v258 = vsub.s32 0, %v257
        %v259 = vadd.s32 %v254, 1
        %vm260 = vcmp.gt.s32.totalorder %v259, 0
        %v261 = vsel %vm260, %v259, 0
        %v262 = vshrl.u32 %v261, 5
        %v263 = vand.u32 %v261, 31
        %v264 = vsub.s32 32, %v263
        %v265 = vshrl.u32 683565275, %v264
        %v266 = vshll.u32 683565275, %v263
        %v267 = vshrl.u32 2475754826, %v264
        %v268 = vor.u32 %v266, %v267
        %v269 = vshll.u32 2475754826, %v263
        %v270 = vshrl.u32 2131351028, %v264
        %v271 = vor.u32 %v269, %v270
        %v272 = vshll.u32 2131351028, %v263
        %v273 = vshrl.u32 2102212464, %v264
        %v274 = vor.u32 %v272, %v273
        %v275 = vshll.u32 2102212464, %v263
        %v276 = vshrl.u32 920167782, %v264
        %v277 = vor.u32 %v275, %v276
        %v278 = vshll.u32 920167782, %v263
        %v279 = vshrl.u32 1326507024, %v264
        %v280 = vor.u32 %v278, %v279
        %vm281 = vcmp.lt.s32.totalorder %v262, 1
        %vm282 = vcmp.lt.s32.totalorder %v262, 2
        %vm283 = vcmp.lt.s32.totalorder %v262, 3
        %vm284 = vcmp.lt.s32.totalorder %v262, 4
        %v285 = vsel %vm281, %v265, %v268
        %v286 = vsel %vm284, %v274, 2102212464
        %v287 = vsel %vm283, %v271, %v286
        %v288 = vsel %vm282, %v285, %v287
        %v289 = vsel %vm281, %v268, %v271
        %v290 = vsel %vm284, %v277, 920167782
        %v291 = vsel %vm283, %v274, %v290
        %v292 = vsel %vm282, %v289, %v291
        %v293 = vsel %vm281, %v271, %v274
        %v294 = vsel %vm284, %v280, 1326507024
        %v295 = vsel %vm283, %v277, %v294
        %v296 = vsel %vm282, %v293, %v295
        %v297 = vshll.u32 %v257, 8
        %v298 = vand.u32 %v297, 65535
        %v299 = vshrl.u32 %v297, 16
        %v300 = vand.u32 %v296, 65535
        %v301 = vshrl.u32 %v296, 16
        %v302 = vmul.u32 %v298, %v300
        %v303 = vmul.u32 %v298, %v301
        %v304 = vmul.u32 %v299, %v300
        %v305 = vmul.u32 %v299, %v301
        %v306 = vshll.u32 %v303, 16
        %v307 = vshrl.u32 %v303, 16
        %v308 = vshll.u32 %v304, 16
        %v309 = vshrl.u32 %v304, 16
        %vm310 = vc.u32 %v302, %v306
        %v311 = vsel %vm310, 1, 0
        %v312 = vadd.s32 %v302, %v306
        %v313 = vadd.s32 %v305, %v311
        %vm314 = vc.u32 %v312, %v308
        %v315 = vsel %vm314, 1, 0
        %v316 = vadd.s32 %v312, %v308
        %v317 = vadd.s32 %v313, %v315
        %v318 = vadd.s32 %v317, %v307
        %v319 = vadd.s32 %v318, %v309
        %v320 = vand.u32 %v297, 65535
        %v321 = vshrl.u32 %v297, 16
        %v322 = vand.u32 %v292, 65535
        %v323 = vshrl.u32 %v292, 16
        %v324 = vmul.u32 %v320, %v322
        %v325 = vmul.u32 %v320, %v323
        %v326 = vmul.u32 %v321, %v322
        %v327 = vmul.u32 %v321, %v323
        %v328 = vshll.u32 %v325, 16
        %v329 = vshrl.u32 %v325, 16
        %v330 = vshll.u32 %v326, 16
        %v331 = vshrl.u32 %v326, 16
        %vm332 = vc.u32 %v324, %v328
        %v333 = vsel %vm332, 1, 0
        %v334 = vadd.s32 %v324, %v328
        %v335 = vadd.s32 %v327, %v333
        %vm336 = vc.u32 %v334, %v330
        %v337 = vsel %vm336, 1, 0
        %v338 = vadd.s32 %v334, %v330
        %v339 = vadd.s32 %v335, %v337
        %v340 = vadd.s32 %v339, %v329
        %v341 = vadd.s32 %v340, %v331
        %v342 = vmul.u32 %v297, %v288
        %v343 = vadd.s32 %v319, %v338
        %vm344 = vc.u32 %v319, %v338
        %v345 = vadd.s32 %v341, 1
        %v346 = vsel %vm344, %v345, %v341
        %v347 = vadd.s32 %v342, %v346
        %v348 = vadd.s32 %v347, 536870912
        %v349 = vshrl.u32 %v348, 30
        %v350 = vshll.u32 %v349, 30
        %v351 = vsub.s32 %v347, %v350
        %vm352 = vcmp.lt.s32.totalorder %v351, 0
        %v353 = vsub.s32 0, %v351
        %v354 = vsel %vm352, %v353, %v351
        %v355 = vclz %v354
        %v356 = vsub.s32 %v355, 2
        %vm357 = vcmp.gt.s32.totalorder 0, %v356
        %v358 = vsel %vm357, 0, %v356
        %v359 = vsub.s32 32, %v358
        %v360 = vshll.u32 %v351, %v358
        %v361 = vshrl.u32 %v343, %v359
        %v362 = vor.u32 %v360, %v361
        %v363 = vsub.s32 4294967266, %v358
        %v364 = vadd.s32 %v363, 127
        %v365 = vshll.u32 %v364, 23
        %v366 = vor.u32 4788187, %v365
        %v367 = vand.u32 2147483647, %v366
        %v369 = vcvt.s32.f32 %v362
        %v370 = vmul.f32 %v369, %v367
        %v371 = vxor.u32 %v370, 2147483648
        %v372 = vsel %vm251, %v371, %v370
        %v373 = vsub.s32 4, %v349
        %v374 = vsel %vm251, %v373, %v349
        %v375 = vsel %vm250, %v248, %v372
        %v376 = vsel %vm250, 0, %v374
        %v377 = vmul.f32 %v375, %v375
        %v378 = vmul.f32 %v377, -0.001358992
        %v379 = vadd.f32 %v378, 0.041655596
        %v380 = vmul.f32 %v377, %v379
        %v381 = vadd.f32 %v380, -0.4999988
        %v382 = vmul.f32 %v377, %v381
        %v383 = vadd.f32 1.0, %v382
        %v384 = vmul.f32 %v375, %v375
        %v385 = vmul.f32 %v384, -0.00019511016
        %v386 = vadd.f32 %v385, 0.008332121
        %v387 = vmul.f32 %v384, %v386
        %v388 = vadd.f32 %v387, -0.16666654
        %v389 = vmul.f32 %v384, %v388
        %v390 = vadd.f32 %v389, 1.0
        %v391 = vmul.f32 %v390, %v375
        %vm392 = vweird.f32 %v248
        %v393 = vand.u32 %v376, 3
        %vm394 = vcmp.lt.s32.totalorder %v393, 2
        %vm395 = vcmp.eq.s32.totalorder %v393, 0
        %v396 = vxor.u32 %v391, 2147483648
        %v397 = vsel %vm395, %v383, %v396
        %vm398 = vcmp.eq.s32.totalorder %v393, 2
        %v399 = vxor.u32 %v383, 2147483648
        %v400 = vsel %vm398, %v399, %v391
        %v401 = vsel %vm394, %v397, %v400
        %v402 = vsel %vm392, nan, %v401
        %v403 = vand.u32 2147483647, %v248
        %vm404 = vcmp.le.f32.partialorder %v403, 0.7853982
        %vm405 = vcmp.lt.s32.totalorder %v248, 0
        %v406 = vand.u32 %v248, 2139095040
        %v407 = vshrl.u32 %v406, 23
        %v408 = vsub.s32 %v407, 127
        %v409 = vand.u32 2147483647, %v248
        %v410 = vand.u32 %v409, 8388607
        %v411 = vor.u32 %v410, 8388608
        %v412 = vsub.s32 0, %v411
        %v413 = vadd.s32 %v408, 1
        %vm414 = vcmp.gt.s32.totalorder %v413, 0
        %v415 = vsel %vm414, %v413, 0
        %v416 = vshrl.u32 %v415, 5
        %v417 = vand.u32 %v415, 31
        %v418 = vsub.s32 32, %v417
        %v419 = vshrl.u32 683565275, %v418
        %v420 = vshll.u32 683565275, %v417
        %v421 = vshrl.u32 2475754826, %v418
        %v422 = vor.u32 %v420, %v421
        %v423 = vshll.u32 2475754826, %v417
        %v424 = vshrl.u32 2131351028, %v418
        %v425 = vor.u32 %v423, %v424
        %v426 = vshll.u32 2131351028, %v417
        %v427 = vshrl.u32 2102212464, %v418
        %v428 = vor.u32 %v426, %v427
        %v429 = vshll.u32 2102212464, %v417
        %v430 = vshrl.u32 920167782, %v418
        %v431 = vor.u32 %v429, %v430
        %v432 = vshll.u32 920167782, %v417
        %v433 = vshrl.u32 1326507024, %v418
        %v434 = vor.u32 %v432, %v433
        %vm435 = vcmp.lt.s32.totalorder %v416, 1
        %vm436 = vcmp.lt.s32.totalorder %v416, 2
        %vm437 = vcmp.lt.s32.totalorder %v416, 3
        %vm438 = vcmp.lt.s32.totalorder %v416, 4
        %v439 = vsel %vm435, %v419, %v422
        %v440 = vsel %vm438, %v428, 2102212464
        %v441 = vsel %vm437, %v425, %v440
        %v442 = vsel %vm436, %v439, %v441
        %v443 = vsel %vm435, %v422, %v425
        %v444 = vsel %vm438, %v431, 920167782
        %v445 = vsel %vm437, %v428, %v444
        %v446 = vsel %vm436, %v443, %v445
        %v447 = vsel %vm435, %v425, %v428
        %v448 = vsel %vm438, %v434, 1326507024
        %v449 = vsel %vm437, %v431, %v448
        %v450 = vsel %vm436, %v447, %v449
        %v451 = vshll.u32 %v411, 8
        %v452 = vand.u32 %v451, 65535
        %v453 = vshrl.u32 %v451, 16
        %v454 = vand.u32 %v450, 65535
        %v455 = vshrl.u32 %v450, 16
        %v456 = vmul.u32 %v452, %v454
        %v457 = vmul.u32 %v452, %v455
        %v458 = vmul.u32 %v453, %v454
        %v459 = vmul.u32 %v453, %v455
        %v460 = vshll.u32 %v457, 16
        %v461 = vshrl.u32 %v457, 16
        %v462 = vshll.u32 %v458, 16
        %v463 = vshrl.u32 %v458, 16
        %vm464 = vc.u32 %v456, %v460
        %v465 = vsel %vm464, 1, 0
        %v466 = vadd.s32 %v456, %v460
        %v467 = vadd.s32 %v459, %v465
        %vm468 = vc.u32 %v466, %v462
        %v469 = vsel %vm468, 1, 0
        %v470 = vadd.s32 %v466, %v462
        %v471 = vadd.s32 %v467, %v469
        %v472 = vadd.s32 %v471, %v461
        %v473 = vadd.s32 %v472, %v463
        %v474 = vand.u32 %v451, 65535
        %v475 = vshrl.u32 %v451, 16
        %v476 = vand.u32 %v446, 65535
        %v477 = vshrl.u32 %v446, 16
        %v478 = vmul.u32 %v474, %v476
        %v479 = vmul.u32 %v474, %v477
        %v480 = vmul.u32 %v475, %v476
        %v481 = vmul.u32 %v475, %v477
        %v482 = vshll.u32 %v479, 16
        %v483 = vshrl.u32 %v479, 16
        %v484 = vshll.u32 %v480, 16
        %v485 = vshrl.u32 %v480, 16
        %vm486 = vc.u32 %v478, %v482
        %v487 = vsel %vm486, 1, 0
        %v488 = vadd.s32 %v478, %v482
        %v489 = vadd.s32 %v481, %v487
        %vm490 = vc.u32 %v488, %v484
        %v491 = vsel %vm490, 1, 0
        %v492 = vadd.s32 %v488, %v484
        %v493 = vadd.s32 %v489, %v491
        %v494 = vadd.s32 %v493, %v483
        %v495 = vadd.s32 %v494, %v485
        %v496 = vmul.u32 %v451, %v442
        %v497 = vadd.s32 %v473, %v492
        %vm498 = vc.u32 %v473, %v492
        %v499 = vadd.s32 %v495, 1
        %v500 = vsel %vm498, %v499, %v495
        %v501 = vadd.s32 %v496, %v500
        %v502 = vadd.s32 %v501, 536870912
        %v503 = vshrl.u32 %v502, 30
        %v504 = vshll.u32 %v503, 30
        %v505 = vsub.s32 %v501, %v504
        %vm506 = vcmp.lt.s32.totalorder %v505, 0
        %v507 = vsub.s32 0, %v505
        %v508 = vsel %vm506, %v507, %v505
        %v509 = vclz %v508
        %v510 = vsub.s32 %v509, 2
        %vm511 = vcmp.gt.s32.totalorder 0, %v510
        %v512 = vsel %vm511, 0, %v510
        %v513 = vsub.s32 32, %v512
        %v514 = vshll.u32 %v505, %v512
        %v515 = vshrl.u32 %v497, %v513
        %v516 = vor.u32 %v514, %v515
        %v517 = vsub.s32 4294967266, %v512
        %v518 = vadd.s32 %v517, 127
        %v519 = vshll.u32 %v518, 23
        %v520 = vor.u32 4788187, %v519
        %v521 = vand.u32 2147483647, %v520
        %v523 = vcvt.s32.f32 %v516
        %v524 = vmul.f32 %v523, %v521
        %v525 = vxor.u32 %v524, 2147483648
        %v526 = vsel %vm405, %v525, %v524
        %v527 = vsub.s32 4, %v503
        %v528 = vsel %vm405, %v527, %v503
        %v529 = vsel %vm404, %v248, %v526
        %v530 = vsel %vm404, 0, %v528
        %v531 = vmul.f32 %v529, %v529
        %v532 = vmul.f32 %v531, -0.001358992
        %v533 = vadd.f32 %v532, 0.041655596
        %v534 = vmul.f32 %v531, %v533
        %v535 = vadd.f32 %v534, -0.4999988
        %v536 = vmul.f32 %v531, %v535
        %v537 = vadd.f32 1.0, %v536
        %v538 = vmul.f32 %v529, %v529
        %v539 = vmul.f32 %v538, -0.00019511016
        %v540 = vadd.f32 %v539, 0.008332121
        %v541 = vmul.f32 %v538, %v540
        %v542 = vadd.f32 %v541, -0.16666654
        %v543 = vmul.f32 %v538, %v542
        %v544 = vadd.f32 %v543, 1.0
        %v545 = vmul.f32 %v544, %v529
        %vm546 = vweird.f32 %v248
        %v547 = vadd.s32 %v530, 3
        %v548 = vand.u32 %v547, 3
        %vm549 = vcmp.lt.s32.totalorder %v548, 2
        %vm550 = vcmp.eq.s32.totalorder %v548, 0
        %v551 = vxor.u32 %v545, 2147483648
        %v552 = vsel %vm550, %v537, %v551
        %vm553 = vcmp.eq.s32.totalorder %v548, 2
        %v554 = vxor.u32 %v537, 2147483648
        %v555 = vsel %vm553, %v554, %v545
        %v556 = vsel %vm549, %v552, %v555
        %v557 = vsel %vm546, nan, %v556
        %v558 = vld [vmem:[%s211] sm:$0xff]
        %v559 = vmul.f32 %v558, %v402
        %561 = vrot.lane.b32.xlu0 %v557, 16
        %v562 = vpop.permute.xlu0 %561
        %v564 = vmul.f32 %v558, %v562
        %566 = vrot.lane.b32.xlu0 %v564, 112
        %v567 = vpop.permute.xlu0 %566
        %v569 = vsub.f32 %v559, %v567
        %v570 = vmul.f32 %v558, %v557
        %572 = vrot.lane.b32.xlu0 %v402, 16
        %v573 = vpop.permute.xlu0 %572
        %v575 = vmul.f32 %v558, %v573
        %577 = vrot.lane.b32.xlu0 %v575, 112
        %v578 = vpop.permute.xlu0 %577
        %v580 = vadd.f32 %v570, %v578
        %582 = vrot.lane.b32.xlu0 %v580, 16
        %v583 = vpop.permute.xlu0 %582
        %vm585 = vcmask 130048
        %v586 = vsel %vm585, %v569, %v583
        %vm587 = vcmask 261120
        %588 = vst.msk [vmem:[%s204] sm:$0xff] %vm587, %v586
        %s589 = sand.u32 %s116, 1
        %s590 = scalar_lea.sflag [#allocation3], %s589
        %s591 = sand.u32 %s116, 1
        %s592 = smul.addr %s591, 8
        %s593 = scalar_lea.vmem [#allocation2], %s592
        // Predicated region
        $region33: #{tpu_custom_call.1} parent=31 // pred_check
          %p594 = pneg %p126
        $region34: #{tpu_custom_call.1} parent=31 // pred_check_branch
          %596 = sbr.rel (%p594) target = $region36
        $region35: #{tpu_custom_call.1} parent=31 // pred_region
          %598 = vsyncadd %s590, 0
          %s599 = sadd.s32 %s22, %s21
          %s600 = smul.addr %s599, 8
          %s601 = scalar_lea.hbm %s3, %s600
          %s603 = sshll.u32 %s593, 4
          %s604 = int_to_ptr.vmem [resolvable:$true] %s603
          %s605 = sshll.u32 %s601, 4
          %s606 = int_to_ptr.hbm [resolvable:$true] %s605
          %608 = dma.vmem_to_hbm [thread:$0]  %s604, 128, %s606, %s590
        $region36: #{tpu_custom_call.1} parent=31 // pred_fallthru
          _
      $region32: #{tpu_custom_call.1} parent=5 // pred_fallthru
        _
      %p609 = scmp.le.s32.totalorder 2, %s12
      // Predicated region
      $region37: #{tpu_custom_call.1} parent=5 // pred_check
        %p610 = pneg %p609
      $region38: #{tpu_custom_call.1} parent=5 // pred_check_branch
        %612 = sbr.rel (%p610) target = $region40
      $region39: #{tpu_custom_call.1} parent=5 // pred_region
        %s613 = ssub.s32 %s12, 2
        // Predicated region
        $region41: #{tpu_custom_call.1} parent=39 // pred_check
          %p614 = pneg %p132
        $region42: #{tpu_custom_call.1} parent=39 // pred_check_branch
          %616 = sbr.rel (%p614) target = $region44
        $region43: #{tpu_custom_call.1} parent=39 // pred_region
          %s617 = sand.u32 %s117, 1
          %s618 = scalar_lea.sflag [#allocation3], %s617
          %s619 = sand.u32 %s117, 1
          %s620 = smul.addr %s619, 8
          %s621 = scalar_lea.vmem [#allocation2], %s620
          %623 = dma.done %s618, 128
        $region44: #{tpu_custom_call.1} parent=39 // pred_fallthru
          _
      $region40: #{tpu_custom_call.1} parent=5 // pred_fallthru
        _
    $region6: #{tpu_custom_call.1} parent=1 // loop_footer
      %s16 = sadd.s32 1, %s12
    $region7: #{tpu_custom_call.1} parent=1 // loop_footer_branch
      %11 = sbr.rel target = $region3
    $region8: #{tpu_custom_call.1} parent=1 // loop_exit
      _
    %624 = vsyncpa [#allocation3], 1
    %s625 = scalar_lea.sflag [#allocation3], 1
    %626 = vsyncpa %s625, 1

</llo_original>
